<compile_context>
chip_gen: v7x
topology: tpu7x:2x2x1
jax: 0.10.0
libtpu: 0.0.40
codegen_flags: <defaults>
</compile_context>

<pallas_src>
import functools

import jax
import jax.numpy as jnp
from jax.experimental import pallas as pl
from jax.experimental.pallas import tpu as pltpu

LANE = 128     # vreg lane width
SUBLANE = 8    # vreg sublane count (f32)


def _round_up(x, m):
    return (x + m - 1) // m * m


def _pick_tb(batch):
    """Batch-tile rows: multiple of 8 sublanes, aim for >=2 grid steps so both
    v7x TensorCores get work, capped at 256 rows.  (On v5e with very large
    batches a 512-1024 cap amortizes the ~0.35us/step overhead even better.)"""
    if batch <= SUBLANE:
        return SUBLANE
    return min(256, _round_up(pl.cdiv(batch, 2), SUBLANE))


# ----------------------------------------------------------------------------
# Kernel: one batch tile per grid step, full 3-layer MLP fused in VMEM.
# ----------------------------------------------------------------------------
def decoder_kernel(z_ref, w1_ref, b1_ref, w2_ref, b2_ref, w3_ref, b3_ref,
                   out_ref):
    """
    z_ref  : (TB, Z)  f32      w1_ref : (Z, Hp)  bf16   b1_ref : (1, Hp) f32
    w2_ref : (Hp, Hp) bf16     b2_ref : (1, Hp)  f32
    w3_ref : (Hp, Op) bf16     b3_ref : (1, Op)  f32
    out_ref: (TB, Op)
    Hp/Op are multiples of 128; TB is a multiple of 8; Z is the true z_dim.
    """
    cdt = w1_ref.dtype  # compute dtype for MXU operands (bf16)

    # Layer 1: Linear + ReLU  (bf16 MXU operands, f32 accumulate, VPU max)
    z = z_ref[...].astype(cdt)
    h1 = jnp.dot(z, w1_ref[...], preferred_element_type=jnp.float32)
    h1 = jnp.maximum(h1 + b1_ref[...], 0.0)

    # Layer 2: Linear + ReLU
    h2 = jnp.dot(h1.astype(cdt), w2_ref[...],
                 preferred_element_type=jnp.float32)
    h2 = jnp.maximum(h2 + b2_ref[...], 0.0)

    # Layer 3: Linear + sigmoid.  Exact sigmoid via tanh: a single EUP op per
    # element, no approx reciprocal (previous accuracy failure) and half the
    # EUP pressure of exp + vrcp.
    o = jnp.dot(h2.astype(cdt), w3_ref[...],
                preferred_element_type=jnp.float32)
    o = o + b3_ref[...]
    sig = 0.5 * (1.0 + jnp.tanh(0.5 * o))
    out_ref[...] = sig.astype(out_ref.dtype)


# ----------------------------------------------------------------------------
# One-time parameter preparation (hoisted out of the per-call forward).
# ----------------------------------------------------------------------------
def prepare_decoder_params(params, compute_dtype=jnp.bfloat16):
    """Pad weights to lane-dense shapes and cast to the MXU compute dtype.
    Call ONCE (e.g. at init); the returned pytree is reused every forward so
    no per-call zeros/scatter HBM passes are paid."""
    w1, b1, w2, b2, w3, b3 = params
    Z, H = w1.shape
    O = w3.shape[1]
    Hp = _round_up(H, LANE)
    Op = _round_up(O, LANE)
    f32 = jnp.float32
    # Zero padding keeps the math exact: padded hidden columns get zero weight
    # + zero bias -> ReLU(0)=0; padded output columns are sliced away.
    w1p = jnp.zeros((Z, Hp), compute_dtype).at[:, :H].set(w1.astype(compute_dtype))
    b1p = jnp.zeros((1, Hp), f32).at[:, :H].set(b1.reshape(1, -1).astype(f32))
    w2p = jnp.zeros((Hp, Hp), compute_dtype).at[:H, :H].set(w2.astype(compute_dtype))
    b2p = jnp.zeros((1, Hp), f32).at[:, :H].set(b2.reshape(1, -1).astype(f32))
    w3p = jnp.zeros((Hp, Op), compute_dtype).at[:H, :O].set(w3.astype(compute_dtype))
    b3p = jnp.zeros((1, Op), f32).at[:, :O].set(b3.reshape(1, -1).astype(f32))
    return (w1p, b1p, w2p, b2p, w3p, b3p)


# ----------------------------------------------------------------------------
# Forward: tile the batch, keep weights resident (single-buffered) in VMEM.
# ----------------------------------------------------------------------------
def decoder_forward(z, prepared_params, output_dim, *, tb=None,
                    out_dtype=jnp.float32, return_padded=False):
    w1p, b1p, w2p, b2p, w3p, b3p = prepared_params
    B, Z = z.shape
    Hp = w1p.shape[1]
    Op = w3p.shape[1]

    if tb is None:
        tb = _pick_tb(B)
    n_steps = pl.cdiv(B, tb)   # no batch padding; tail tile is masked

    # Explicit scoped-VMEM budget: resident weights (single-buffered) +
    # double-buffered z/out tiles + activation temps, with 2x headroom,
    # capped safely below v7x's 64 MiB physical VMEM.
    w_itemsize = jnp.dtype(w1p.dtype).itemsize
    weight_bytes = (w1p.size + w2p.size + w3p.size) * w_itemsize \
                   + (b1p.size + b2p.size + b3p.size) * 4
    act_bytes = 2 * tb * (Z + Op) * 4 + 4 * tb * Hp * 4
    vmem_limit = min(2 * int(weight_bytes + act_bytes) + (8 << 20), 56 << 20)

    # Advisory cost estimate for XLA's scheduler.
    flops = 2 * B * (Z * Hp + Hp * Hp + Hp * Op) + 3 * B * (2 * Hp + Op)
    transcendentals = B * Op  # tanh in sigmoid
    bytes_accessed = int(B * Z * 4 + weight_bytes
                         + B * Op * jnp.dtype(out_dtype).itemsize)
    cost = pl.CostEstimate(flops=flops, transcendentals=transcendentals,
                           bytes_accessed=bytes_accessed)

    # Constant-index weight/bias specs: resident across grid steps and
    # single-buffered (no wasted second pipeline buffer).
    resident = functools.partial(pl.BlockSpec, pipeline_mode=pl.Buffered(1))

    out_padded = pl.pallas_call(
        decoder_kernel,
        out_shape=jax.ShapeDtypeStruct((B, Op), out_dtype),
        grid=(n_steps,),
        in_specs=[
            pl.BlockSpec((tb, Z), lambda i: (i, 0)),    # z tile (streamed)
            resident((Z, Hp), lambda i: (0, 0)),        # weights: resident
            resident((1, Hp), lambda i: (0, 0)),
            resident((Hp, Hp), lambda i: (0, 0)),
            resident((1, Hp), lambda i: (0, 0)),
            resident((Hp, Op), lambda i: (0, 0)),
            resident((1, Op), lambda i: (0, 0)),
        ],
        out_specs=pl.BlockSpec((tb, Op), lambda i: (i, 0)),
        compiler_params=pltpu.CompilerParams(
            dimension_semantics=("parallel",),          # v7x: 2 TCs split batch
            vmem_limit_bytes=vmem_limit),
        cost_estimate=cost,
    )(z, w1p, b1p, w2p, b2p, w3p, b3p)

    if return_padded or Op == output_dim:
        # Consumers that can take the lane-padded buffer skip an HBM pass.
        return out_padded
    return out_padded[:, :output_dim]


# ----------------------------------------------------------------------------
# Parameter init (Kaiming-uniform-ish like nn.Linear) and pure-JAX reference.
# ----------------------------------------------------------------------------
def init_params(key, z_dim, hidden_dim, output_dim):
    ks = jax.random.split(key, 6)

    def lin(kw, kb, fan_in, fan_out):
        bound = 1.0 / jnp.sqrt(fan_in)
        w = jax.random.uniform(kw, (fan_in, fan_out), jnp.float32,
                               -bound, bound)
        b = jax.random.uniform(kb, (1, fan_out), jnp.float32, -bound, bound)
        return w, b

    w1, b1 = lin(ks[0], ks[1], z_dim, hidden_dim)
    w2, b2 = lin(ks[2], ks[3], hidden_dim, hidden_dim)
    w3, b3 = lin(ks[4], ks[5], hidden_dim, output_dim)
    return (w1, b1, w2, b2, w3, b3)


def decoder_reference(z, params):
    w1, b1, w2, b2, w3, b3 = params
    h = jnp.maximum(z @ w1 + b1, 0.0)
    h = jnp.maximum(h @ w2 + b2, 0.0)
    return jax.nn.sigmoid(h @ w3 + b3)


if __name__ == "__main__":
    # Small shapes consistent with the module's forward: z is (batch, z_dim).
    # batch=16 with tb=8 gives 2 grid steps (both v7x TensorCores get work).
    batch, z_dim, hidden_dim, output_dim = 16, 8, 32, 64

    key = jax.random.PRNGKey(0)
    k_z, k_p = jax.random.split(key)
    z = jax.random.normal(k_z, (batch, z_dim), jnp.float32)
    params = init_params(k_p, z_dim, hidden_dim, output_dim)

    # Pad/cast weights once (outside the per-call path).
    prepared = prepare_decoder_params(params, compute_dtype=jnp.bfloat16)

    fwd = jax.jit(functools.partial(decoder_forward, output_dim=output_dim))
    out = jax.block_until_ready(fwd(z, prepared))

    ref = decoder_reference(z, params)
    assert out.shape == (batch, output_dim)
    # Tolerance 2e-2: the only approximation is bf16 quantization of the MXU
    # operands (f32 accumulate, exact sigmoid); at these shapes the observed
    # error is ~1e-3 on outputs in [0, 1].
    max_err = float(jnp.max(jnp.abs(out - ref)))
    assert max_err < 2e-2, f"mismatch vs reference, max abs err {max_err}"

    print("KERNEL_OK")
</pallas_src>

<mosaic_0001>
module attributes {stable_mosaic.version = 11 : i64} {
  func.func @decoder_kernel(%arg0: i32, %arg1: memref<8x8xf32, #tpu.memory_space<vmem>>, %arg2: memref<8x128xbf16, #tpu.memory_space<vmem>>, %arg3: memref<1x128xf32, #tpu.memory_space<vmem>>, %arg4: memref<128x128xbf16, #tpu.memory_space<vmem>>, %arg5: memref<1x128xf32, #tpu.memory_space<vmem>>, %arg6: memref<128x128xbf16, #tpu.memory_space<vmem>>, %arg7: memref<1x128xf32, #tpu.memory_space<vmem>>, %arg8: memref<8x128xf32, #tpu.memory_space<vmem>>) attributes {dimension_semantics = [#tpu.dimension_semantics<parallel>], iteration_bounds = array<i64: 2>, scalar_prefetch = 0 : i64, scratch_operands = 0 : i64, tpu.core_type = #tpu.core_type<tc>, window_params = [{transform_indices = @transform_0, window_bounds = array<i64: 8, 8>}, {pipeline_mode = #tpu.pipeline_mode<synchronous>, transform_indices = @transform_1, window_bounds = array<i64: 8, 128>}, {pipeline_mode = #tpu.pipeline_mode<synchronous>, transform_indices = @transform_2, window_bounds = array<i64: 1, 128>}, {pipeline_mode = #tpu.pipeline_mode<synchronous>, transform_indices = @transform_3, window_bounds = array<i64: 128, 128>}, {pipeline_mode = #tpu.pipeline_mode<synchronous>, transform_indices = @transform_4, window_bounds = array<i64: 1, 128>}, {pipeline_mode = #tpu.pipeline_mode<synchronous>, transform_indices = @transform_5, window_bounds = array<i64: 128, 128>}, {pipeline_mode = #tpu.pipeline_mode<synchronous>, transform_indices = @transform_6, window_bounds = array<i64: 1, 128>}, {transform_indices = @transform_7, window_bounds = array<i64: 8, 128>}]} {
    %c0 = arith.constant 0 : index
    %c0_0 = arith.constant 0 : index
    %0 = vector.load %arg1[%c0, %c0_0] : memref<8x8xf32, #tpu.memory_space<vmem>>, vector<8x8xf32>
    %1 = arith.truncf %0 : vector<8x8xf32> to vector<8x8xbf16>
    %c0_1 = arith.constant 0 : index
    %c0_2 = arith.constant 0 : index
    %2 = vector.load %arg2[%c0_1, %c0_2] : memref<8x128xbf16, #tpu.memory_space<vmem>>, vector<8x128xbf16>
    %cst = arith.constant dense<0.000000e+00> : vector<8x128xf32>
    %3 = tpu.matmul %1, %2, %cst {dimension_numbers = #tpu.dot_dimension_numbers<[1], [0], [0], [1], [0, 0, 1, 1], [], []>} : vector<8x8xbf16>, vector<8x128xbf16>, vector<8x128xf32> -> vector<8x128xf32>
    %c0_3 = arith.constant 0 : index
    %c0_4 = arith.constant 0 : index
    %4 = vector.load %arg3[%c0_3, %c0_4] : memref<1x128xf32, #tpu.memory_space<vmem>>, vector<1x128xf32>
    %5 = vector.broadcast %4 : vector<1x128xf32> to vector<8x128xf32>
    %6 = arith.addf %3, %5 : vector<8x128xf32>
    %cst_5 = arith.constant 0.000000e+00 : f32
    %7 = vector.broadcast %cst_5 : f32 to vector<8x128xf32>
    %8 = arith.maximumf %6, %7 : vector<8x128xf32>
    %9 = arith.truncf %8 : vector<8x128xf32> to vector<8x128xbf16>
    %c0_6 = arith.constant 0 : index
    %c0_7 = arith.constant 0 : index
    %10 = vector.load %arg4[%c0_6, %c0_7] : memref<128x128xbf16, #tpu.memory_space<vmem>>, vector<128x128xbf16>
    %cst_8 = arith.constant dense<0.000000e+00> : vector<8x128xf32>
    %11 = tpu.matmul %9, %10, %cst_8 {dimension_numbers = #tpu.dot_dimension_numbers<[1], [0], [0], [1], [0, 0, 1, 1], [], []>} : vector<8x128xbf16>, vector<128x128xbf16>, vector<8x128xf32> -> vector<8x128xf32>
    %c0_9 = arith.constant 0 : index
    %c0_10 = arith.constant 0 : index
    %12 = vector.load %arg5[%c0_9, %c0_10] : memref<1x128xf32, #tpu.memory_space<vmem>>, vector<1x128xf32>
    %13 = vector.broadcast %12 : vector<1x128xf32> to vector<8x128xf32>
    %14 = arith.addf %11, %13 : vector<8x128xf32>
    %cst_11 = arith.constant 0.000000e+00 : f32
    %15 = vector.broadcast %cst_11 : f32 to vector<8x128xf32>
    %16 = arith.maximumf %14, %15 : vector<8x128xf32>
    %17 = arith.truncf %16 : vector<8x128xf32> to vector<8x128xbf16>
    %c0_12 = arith.constant 0 : index
    %c0_13 = arith.constant 0 : index
    %18 = vector.load %arg6[%c0_12, %c0_13] : memref<128x128xbf16, #tpu.memory_space<vmem>>, vector<128x128xbf16>
    %cst_14 = arith.constant dense<0.000000e+00> : vector<8x128xf32>
    %19 = tpu.matmul %17, %18, %cst_14 {dimension_numbers = #tpu.dot_dimension_numbers<[1], [0], [0], [1], [0, 0, 1, 1], [], []>} : vector<8x128xbf16>, vector<128x128xbf16>, vector<8x128xf32> -> vector<8x128xf32>
    %c0_15 = arith.constant 0 : index
    %c0_16 = arith.constant 0 : index
    %20 = vector.load %arg7[%c0_15, %c0_16] : memref<1x128xf32, #tpu.memory_space<vmem>>, vector<1x128xf32>
    %21 = vector.broadcast %20 : vector<1x128xf32> to vector<8x128xf32>
    %22 = arith.addf %19, %21 : vector<8x128xf32>
    %cst_17 = arith.constant 5.000000e-01 : f32
    %23 = vector.broadcast %cst_17 : f32 to vector<8x128xf32>
    %24 = arith.mulf %23, %22 : vector<8x128xf32>
    %25 = math.tanh %24 : vector<8x128xf32>
    %cst_18 = arith.constant 1.000000e+00 : f32
    %26 = vector.broadcast %cst_18 : f32 to vector<8x128xf32>
    %27 = arith.addf %26, %25 : vector<8x128xf32>
    %cst_19 = arith.constant 5.000000e-01 : f32
    %28 = vector.broadcast %cst_19 : f32 to vector<8x128xf32>
    %29 = arith.mulf %28, %27 : vector<8x128xf32>
    %c0_20 = arith.constant 0 : index
    %c0_21 = arith.constant 0 : index
    %30 = vector.load %arg8[%c0_20, %c0_21] : memref<8x128xf32, #tpu.memory_space<vmem>>, vector<8x128xf32>
    tpu.vector_store %arg8[%c0_20, %c0_21], %29 {strides = array<i32>} : memref<8x128xf32, #tpu.memory_space<vmem>>, vector<8x128xf32>,
    return
  }
  func.func @transform_0(%arg0: i32) -> (i32, i32) {
    %c0_i32 = arith.constant 0 : i32
    %c0_i32_0 = arith.constant 0 : i32
    return %arg0, %c0_i32 : i32, i32
  }
  func.func @transform_1(%arg0: i32) -> (i32, i32) {
    %c0_i32 = arith.constant 0 : i32
    %c0_i32_0 = arith.constant 0 : i32
    %c0_i32_1 = arith.constant 0 : i32
    return %c0_i32, %c0_i32_0 : i32, i32
  }
  func.func @transform_2(%arg0: i32) -> (i32, i32) {
    %c0_i32 = arith.constant 0 : i32
    %c0_i32_0 = arith.constant 0 : i32
    %c0_i32_1 = arith.constant 0 : i32
    return %c0_i32, %c0_i32_0 : i32, i32
  }
  func.func @transform_3(%arg0: i32) -> (i32, i32) {
    %c0_i32 = arith.constant 0 : i32
    %c0_i32_0 = arith.constant 0 : i32
    %c0_i32_1 = arith.constant 0 : i32
    return %c0_i32, %c0_i32_0 : i32, i32
  }
  func.func @transform_4(%arg0: i32) -> (i32, i32) {
    %c0_i32 = arith.constant 0 : i32
    %c0_i32_0 = arith.constant 0 : i32
    %c0_i32_1 = arith.constant 0 : i32
    return %c0_i32, %c0_i32_0 : i32, i32
  }
  func.func @transform_5(%arg0: i32) -> (i32, i32) {
    %c0_i32 = arith.constant 0 : i32
    %c0_i32_0 = arith.constant 0 : i32
    %c0_i32_1 = arith.constant 0 : i32
    return %c0_i32, %c0_i32_0 : i32, i32
  }
  func.func @transform_6(%arg0: i32) -> (i32, i32) {
    %c0_i32 = arith.constant 0 : i32
    %c0_i32_0 = arith.constant 0 : i32
    %c0_i32_1 = arith.constant 0 : i32
    return %c0_i32, %c0_i32_0 : i32, i32
  }
  func.func @transform_7(%arg0: i32) -> (i32, i32) {
    %c0_i32 = arith.constant 0 : i32
    %c0_i32_0 = arith.constant 0 : i32
    return %arg0, %c0_i32 : i32, i32
  }
}

</mosaic_0001>

<llo_original>
// kernel: decoder_forward.1
$region0: #{decoder_forward.1}
  #allocation0 [shape = 'u32[]', space=smem, size = 0x4, offset = 0x4, fixed_abs, tag = 'smem constant byte address 0x4 - core index']
  #allocation1 [shape = 'u32[144,128]{1,0:T(1,128)}', space=vmem, size = 0x12000, scoped, tag = 'internal scratch']
  %s0 = inlined_call_operand.vmem [shape: f32[16,8], index: 0, kind: input, shape index: {}]
  %s1 = inlined_call_operand.vmem [shape: bf16[8,128], index: 1, kind: input, shape index: {}]
  %s2 = inlined_call_operand.vmem [shape: f32[1,128], index: 2, kind: input, shape index: {}]
  %s3 = inlined_call_operand.hbm [shape: bf16[128,128], index: 3, kind: input, shape index: {}]
  %s4 = inlined_call_operand.vmem [shape: f32[1,128], index: 4, kind: input, shape index: {}]
  %s5 = inlined_call_operand.hbm [shape: bf16[128,128], index: 5, kind: input, shape index: {}]
  %s6 = inlined_call_operand.vmem [shape: f32[1,128], index: 6, kind: input, shape index: {}]
  %s7 = inlined_call_operand.hbm [shape: f32[16,128], index: 7, kind: output, shape index: {}]
  %s8 = sld [smem:[#allocation0]]
  $region69: #{decoder_forward.1} parent=0
    _
  %s10 = ssub.s32 1, %s8
  %s11 = scalar_select 0, %s10, %s8
  $region1: #{decoder_forward.1} parent=0
    #allocation2 [shape = 'u8[32768]{0}', space=vmem, size = 0x8000, scoped, tag = 'input window, operand 3, single buffered']
    #allocation3 [shape = 's32[2]{0}', space=sflag, size = 0x8, scoped, tag = 'scoped memory for decoder_forward.1']
    #allocation4 [shape = 's32[2]{0}', space=sflag, size = 0x8, scoped, tag = 'scoped memory for decoder_forward.1']
    #allocation5 [shape = 'u8[32768]{0}', space=vmem, size = 0x8000, scoped, tag = 'input window, operand 5, single buffered']
    #allocation6 [shape = 's32[1]{0}', space=sflag, size = 0x4, scoped, tag = 'scoped memory for decoder_forward.1']
    #allocation7 [shape = 'u8[8192]{0}', space=vmem, size = 0x2000, scoped, tag = 'output window, operand 0']
    %12 = vsyncpa [#allocation3], 0
    %13 = vsyncpa [#allocation6], 0
    %14 = vsyncpa [#allocation4], 0
    %s15 = scalar_lea.sflag [#allocation4], 1
    %16 = vsyncpa %s15, 0
    loop: start=0, step=1, limit=4
    $region2: #{decoder_forward.1} parent=1 // loop_pre_header
      _
    $region3: #{decoder_forward.1} parent=1 // loop_header
      %s18 = sphi 0, %s22
      %p19 = scmp.ge.s32.totalorder %s18, 4
      %s28 = sphi 0, %s30
      %s31 = sphi 0, %s28
      %s32 = sphi 0, %s31
      %s48 = sphi 0, %s32
      %s52 = sphi 0, %s52
      %s54 = sphi 0, %s52
      %s55 = sphi 0, %s54
      %s69 = sphi 0, %s55
      %s73 = sphi 0, %s73
      %s75 = sphi 0, %s73
      %s76 = sphi 0, %s75
      %s90 = sphi 0, %s76
      %s94 = sphi 0, %s94
      %s96 = sphi 0, %s94
      %s97 = sphi 0, %s96
      %s111 = sphi 0, %s97
      %s115 = sphi 0, %s115
      %s117 = sphi 0, %s115
      %s118 = sphi 0, %s117
      %s132 = sphi 0, %s118
      %s136 = sphi 0, %s136
      %s138 = sphi 0, %s136
      %s139 = sphi 0, %s138
      %s153 = sphi 0, %s139
      %s157 = sphi 0, %s157
      %s159 = sphi 0, %s157
      %s160 = sphi 0, %s159
      %s174 = sphi 0, %s160
      %s180 = sphi 0, %s182
      %s183 = sphi 0, %s180
      %s184 = sphi 0, %s183
      %s200 = sphi 0, %s184
    $region4: #{decoder_forward.1} parent=1 // loop_header_branch
      %21 = sbr.rel (%p19) target = $region8
    $region5: #{decoder_forward.1} parent=1 // loop_body
      %s23 = ssub.s32 %s18, 1
      %s24 = ssub.s32 %s18, 2
      %s25 = sadd.s32 %s18, 1
      %s26 = ssub.s32 %s18, %s25
      %p27 = scmp.eq.s32.totalorder %s26, 0
      %s29 = sadd.s32 %s28, 1
      %s30 = scalar_select %p27, %s28, %s29
      %p33 = pneg %p27
      %p34 = scmp.eq.s32.totalorder %s18, 1
      %p35 = por %p33, %p34
      %p36 = scmp.ne.s32.totalorder %s28, %s31
      %p37 = scmp.eq.s32.totalorder %s18, 0
      %p38 = por %p36, %p37
      %p39 = scmp.ne.s32.totalorder %s28, %s31
      %p40 = scmp.eq.s32.totalorder %s23, 1
      %p41 = por %p39, %p40
      %p42 = scmp.ne.s32.totalorder %s31, %s32
      %p43 = scmp.eq.s32.totalorder %s23, 0
      %p44 = por %p42, %p43
      %p45 = scmp.ne.s32.totalorder %s31, %s32
      %p46 = scmp.eq.s32.totalorder %s24, 1
      %p47 = por %p45, %p46
      %p49 = scmp.ne.s32.totalorder %s32, %s48
      %p50 = scmp.eq.s32.totalorder %s24, 0
      %p51 = por %p49, %p50
      %s53 = sadd.s32 %s52, 1
      %p56 = scmp.eq.s32.totalorder %s18, 1
      %p57 = scmp.ne.s32.totalorder %s52, %s54
      %p58 = scmp.eq.s32.totalorder %s18, 0
      %p59 = por %p57, %p58
      %p60 = scmp.ne.s32.totalorder %s52, %s54
      %p61 = scmp.eq.s32.totalorder %s23, 1
      %p62 = por %p60, %p61
      %p63 = scmp.ne.s32.totalorder %s54, %s55
      %p64 = scmp.eq.s32.totalorder %s23, 0
      %p65 = por %p63, %p64
      %p66 = scmp.ne.s32.totalorder %s54, %s55
      %p67 = scmp.eq.s32.totalorder %s24, 1
      %p68 = por %p66, %p67
      %p70 = scmp.ne.s32.totalorder %s55, %s69
      %p71 = scmp.eq.s32.totalorder %s24, 0
      %p72 = por %p70, %p71
      %s74 = sadd.s32 %s73, 1
      %p77 = scmp.eq.s32.totalorder %s18, 1
      %p78 = scmp.ne.s32.totalorder %s73, %s75
      %p79 = scmp.eq.s32.totalorder %s18, 0
      %p80 = por %p78, %p79
      %p81 = scmp.ne.s32.totalorder %s73, %s75
      %p82 = scmp.eq.s32.totalorder %s23, 1
      %p83 = por %p81, %p82
      %p84 = scmp.ne.s32.totalorder %s75, %s76
      %p85 = scmp.eq.s32.totalorder %s23, 0
      %p86 = por %p84, %p85
      %p87 = scmp.ne.s32.totalorder %s75, %s76
      %p88 = scmp.eq.s32.totalorder %s24, 1
      %p89 = por %p87, %p88
      %p91 = scmp.ne.s32.totalorder %s76, %s90
      %p92 = scmp.eq.s32.totalorder %s24, 0
      %p93 = por %p91, %p92
      %s95 = sadd.s32 %s94, 1
      %p98 = scmp.eq.s32.totalorder %s18, 1
      %p99 = scmp.ne.s32.totalorder %s94, %s96
      %p100 = scmp.eq.s32.totalorder %s18, 0
      %p101 = por %p99, %p100
      %p102 = scmp.ne.s32.totalorder %s94, %s96
      %p103 = scmp.eq.s32.totalorder %s23, 1
      %p104 = por %p102, %p103
      %p105 = scmp.ne.s32.totalorder %s96, %s97
      %p106 = scmp.eq.s32.totalorder %s23, 0
      %p107 = por %p105, %p106
      %p108 = scmp.ne.s32.totalorder %s96, %s97
      %p109 = scmp.eq.s32.totalorder %s24, 1
      %p110 = por %p108, %p109
      %p112 = scmp.ne.s32.totalorder %s97, %s111
      %p113 = scmp.eq.s32.totalorder %s24, 0
      %p114 = por %p112, %p113
      %s116 = sadd.s32 %s115, 1
      %p119 = scmp.eq.s32.totalorder %s18, 1
      %p120 = scmp.ne.s32.totalorder %s115, %s117
      %p121 = scmp.eq.s32.totalorder %s18, 0
      %p122 = por %p120, %p121
      %p123 = scmp.ne.s32.totalorder %s115, %s117
      %p124 = scmp.eq.s32.totalorder %s23, 1
      %p125 = por %p123, %p124
      %p126 = scmp.ne.s32.totalorder %s117, %s118
      %p127 = scmp.eq.s32.totalorder %s23, 0
      %p128 = por %p126, %p127
      %p129 = scmp.ne.s32.totalorder %s117, %s118
      %p130 = scmp.eq.s32.totalorder %s24, 1
      %p131 = por %p129, %p130
      %p133 = scmp.ne.s32.totalorder %s118, %s132
      %p134 = scmp.eq.s32.totalorder %s24, 0
      %p135 = por %p133, %p134
      %s137 = sadd.s32 %s136, 1
      %p140 = scmp.eq.s32.totalorder %s18, 1
      %p141 = scmp.ne.s32.totalorder %s136, %s138
      %p142 = scmp.eq.s32.totalorder %s18, 0
      %p143 = por %p141, %p142
      %p144 = scmp.ne.s32.totalorder %s136, %s138
      %p145 = scmp.eq.s32.totalorder %s23, 1
      %p146 = por %p144, %p145
      %p147 = scmp.ne.s32.totalorder %s138, %s139
      %p148 = scmp.eq.s32.totalorder %s23, 0
      %p149 = por %p147, %p148
      %p150 = scmp.ne.s32.totalorder %s138, %s139
      %p151 = scmp.eq.s32.totalorder %s24, 1
      %p152 = por %p150, %p151
      %p154 = scmp.ne.s32.totalorder %s139, %s153
      %p155 = scmp.eq.s32.totalorder %s24, 0
      %p156 = por %p154, %p155
      %s158 = sadd.s32 %s157, 1
      %p161 = scmp.eq.s32.totalorder %s18, 1
      %p162 = scmp.ne.s32.totalorder %s157, %s159
      %p163 = scmp.eq.s32.totalorder %s18, 0
      %p164 = por %p162, %p163
      %p165 = scmp.ne.s32.totalorder %s157, %s159
      %p166 = scmp.eq.s32.totalorder %s23, 1
      %p167 = por %p165, %p166
      %p168 = scmp.ne.s32.totalorder %s159, %s160
      %p169 = scmp.eq.s32.totalorder %s23, 0
      %p170 = por %p168, %p169
      %p171 = scmp.ne.s32.totalorder %s159, %s160
      %p172 = scmp.eq.s32.totalorder %s24, 1
      %p173 = por %p171, %p172
      %p175 = scmp.ne.s32.totalorder %s160, %s174
      %p176 = scmp.eq.s32.totalorder %s24, 0
      %p177 = por %p175, %p176
      %s178 = ssub.s32 %s18, %s25
      %p179 = scmp.eq.s32.totalorder %s178, 0
      %s181 = sadd.s32 %s180, 1
      %s182 = scalar_select %p179, %s180, %s181
      %p185 = pneg %p179
      %p186 = scmp.eq.s32.totalorder %s18, 1
      %p187 = por %p185, %p186
      %p188 = scmp.ne.s32.totalorder %s180, %s183
      %p189 = scmp.eq.s32.totalorder %s18, 0
      %p190 = por %p188, %p189
      %p191 = scmp.ne.s32.totalorder %s180, %s183
      %p192 = scmp.eq.s32.totalorder %s23, 1
      %p193 = por %p191, %p192
      %p194 = scmp.ne.s32.totalorder %s183, %s184
      %p195 = scmp.eq.s32.totalorder %s23, 0
      %p196 = por %p194, %p195
      %p197 = scmp.ne.s32.totalorder %s183, %s184
      %p198 = scmp.eq.s32.totalorder %s24, 1
      %p199 = por %p197, %p198
      %p201 = scmp.ne.s32.totalorder %s184, %s200
      %p202 = scmp.eq.s32.totalorder %s24, 0
      %p203 = por %p201, %p202
      %p204 = scmp.le.s32.totalorder 1, %s18
      %p205 = scmp.lt.s32.totalorder %s18, 3
      %p206 = pnand %p204, %p205
      %p207 = pneg %p206
      // Predicated region
      $region9: #{decoder_forward.1} parent=5 // pred_check
        _
      $region10: #{decoder_forward.1} parent=5 // pred_check_branch
        %209 = sbr.rel (%p206) target = $region12
      $region11: #{decoder_forward.1} parent=5 // pred_region
        %s210 = ssub.s32 %s18, 1
        // Predicated region
        $region13: #{decoder_forward.1} parent=11 // pred_check
          %p211 = pneg %p65
        $region14: #{decoder_forward.1} parent=11 // pred_check_branch
          %213 = sbr.rel (%p211) target = $region16
        $region15: #{decoder_forward.1} parent=11 // pred_region
          _
        $region16: #{decoder_forward.1} parent=11 // pred_fallthru
          _
        // Predicated region
        $region17: #{decoder_forward.1} parent=11 // pred_check
          %p214 = pneg %p86
        $region18: #{decoder_forward.1} parent=11 // pred_check_branch
          %216 = sbr.rel (%p214) target = $region20
        $region19: #{decoder_forward.1} parent=11 // pred_region
          _
        $region20: #{decoder_forward.1} parent=11 // pred_fallthru
          _
        // Predicated region
        $region21: #{decoder_forward.1} parent=11 // pred_check
          %p217 = pneg %p107
        $region22: #{decoder_forward.1} parent=11 // pred_check_branch
          %219 = sbr.rel (%p217) target = $region24
        $region23: #{decoder_forward.1} parent=11 // pred_region
          %s221 = ssub.s32 1024, 1024
          %222 = vsyncadd [#allocation3], %s221
          %s223 = sshll.u32 [#allocation2], 4
          %s224 = int_to_ptr.vmem [resolvable:$true] %s223
          %229 = dma.hbm_to_vmem [thread:$0]  %s3, 1024, %s224, [#allocation3], 64, 64, 4
        $region24: #{decoder_forward.1} parent=11 // pred_fallthru
          _
        // Predicated region
        $region25: #{decoder_forward.1} parent=11 // pred_check
          %p230 = pneg %p128
        $region26: #{decoder_forward.1} parent=11 // pred_check_branch
          %232 = sbr.rel (%p230) target = $region28
        $region27: #{decoder_forward.1} parent=11 // pred_region
          _
        $region28: #{decoder_forward.1} parent=11 // pred_fallthru
          _
        // Predicated region
        $region29: #{decoder_forward.1} parent=11 // pred_check
          %p233 = pneg %p149
        $region30: #{decoder_forward.1} parent=11 // pred_check_branch
          %235 = sbr.rel (%p233) target = $region32
        $region31: #{decoder_forward.1} parent=11 // pred_region
          %s237 = ssub.s32 1024, 1024
          %238 = vsyncadd [#allocation6], %s237
          %s239 = sshll.u32 [#allocation5], 4
          %s240 = int_to_ptr.vmem [resolvable:$true] %s239
          %245 = dma.hbm_to_vmem [thread:$0]  %s5, 1024, %s240, [#allocation6], 64, 64, 4
        $region32: #{decoder_forward.1} parent=11 // pred_fallthru
          _
        // Predicated region
        $region33: #{decoder_forward.1} parent=11 // pred_check
          %p246 = pneg %p170
        $region34: #{decoder_forward.1} parent=11 // pred_check_branch
          %248 = sbr.rel (%p246) target = $region36
        $region35: #{decoder_forward.1} parent=11 // pred_region
          _
        $region36: #{decoder_forward.1} parent=11 // pred_fallthru
          _
      $region12: #{decoder_forward.1} parent=5 // pred_fallthru
        _
      %p249 = scmp.lt.s32.totalorder %s18, 2
      // Predicated region
      $region37: #{decoder_forward.1} parent=5 // pred_check
        %p250 = pneg %p249
      $region38: #{decoder_forward.1} parent=5 // pred_check_branch
        %252 = sbr.rel (%p250) target = $region40
      $region39: #{decoder_forward.1} parent=5 // pred_region
        // Predicated region
        $region41: #{decoder_forward.1} parent=39 // pred_check
          %p253 = pneg %p38
        $region42: #{decoder_forward.1} parent=39 // pred_check_branch
          %255 = sbr.rel (%p253) target = $region44
        $region43: #{decoder_forward.1} parent=39 // pred_region
          %p256 = scmp.lt.s32.totalorder %s18, 1
          %s257 = scalar_select %p256, %s18, 1
          %s258 = smul.addr %s257, 8
          %s259 = scalar_lea.vmem %s0, %s258
        $region44: #{decoder_forward.1} parent=39 // pred_fallthru
          _
      $region40: #{decoder_forward.1} parent=5 // pred_fallthru
        _
      %p260 = scmp.le.s32.totalorder 1, %s18
      %p261 = scmp.lt.s32.totalorder %s18, 3
      %p262 = pnand %p260, %p261
      %p263 = pneg %p262
      // Predicated region
      $region45: #{decoder_forward.1} parent=5 // pred_check
        _
      $region46: #{decoder_forward.1} parent=5 // pred_check_branch
        %265 = sbr.rel (%p262) target = $region48
      $region47: #{decoder_forward.1} parent=5 // pred_region
        %s266 = ssub.s32 %s18, 1
        // Predicated region
        $region49: #{decoder_forward.1} parent=47 // pred_check
          %p267 = pneg %p107
        $region50: #{decoder_forward.1} parent=47 // pred_check_branch
          %269 = sbr.rel (%p267) target = $region52
        $region51: #{decoder_forward.1} parent=47 // pred_region
          %270 = dma.done [#allocation3], 1024
        $region52: #{decoder_forward.1} parent=47 // pred_fallthru
          _
        // Predicated region
        $region53: #{decoder_forward.1} parent=47 // pred_check
          %p271 = pneg %p149
        $region54: #{decoder_forward.1} parent=47 // pred_check_branch
          %273 = sbr.rel (%p271) target = $region56
        $region55: #{decoder_forward.1} parent=47 // pred_region
          %274 = dma.done [#allocation6], 1024
        $region56: #{decoder_forward.1} parent=47 // pred_fallthru
          _
        %p275 = scmp.lt.s32.totalorder %s23, 1
        %s276 = scalar_select %p275, %s23, 1
        %s277 = smul.addr %s276, 8
        %s278 = scalar_lea.vmem %s0, %s277
        %p279 = pneg %p44
        %p280 = pneg %p41
        %p281 = pneg %p65
        %p282 = pneg %p62
        %p283 = pneg %p86
        %p284 = pneg %p83
        %p285 = pneg %p107
        %p286 = pneg %p104
        %p287 = pneg %p128
        %p288 = pneg %p125
        %p289 = pneg %p149
        %p290 = pneg %p146
        %p291 = pneg %p170
        %p292 = pneg %p167
        %p293 = pneg %p196
        %p294 = pneg %p193
        %s295 = sand.u32 %s183, 1
        %s296 = scalar_lea.sflag [#allocation4], %s295
        %s297 = sand.u32 %s183, 1
        %s298 = smul.addr %s297, 8
        %s299 = scalar_lea.vmem [#allocation7], %s298
        %p300 = scmp.lt.s32.totalorder %s23, 1
        %s301 = scalar_select %p300, %s23, 1
        %s302 = smul.addr %s301, 8
        %s303 = scalar_lea.vmem %s0, %s302
        %v305 = vld [vmem:[%s303] sm:$0xff]
        %v306 = vpack.c.bf16 %v305, %v305
        %v307 = vld [vmem:[%s1] sm:$0xf]
        %v308 = vld [vmem:[%s2] sm:$0x1]
        %v310 = vlaneseq
        %v311 = vshrl.u32 %v310, 7
        %v312 = vsub.s32 0, %v311
        %v313 = vrot.slane %v308, %v312
        %vm315 = vcmask 64512
        %v317 = vsel %vm315, %v306, 0
        %vm319 = vcmask 1043456
        %v321 = vsel %vm319, %v307, 0
        %323 = vmatprep.subr.bf16.mxu0 0
        %324 = vmatpush1.bf16.msra.mxu0 %v321
        %325 = vmatprep.subr.bf16.mxu0 0
        %326 = vmatpush1.bf16.msra.mxu0 0
        %327 = vmatprep.subr.bf16.mxu0 0
        %328 = vmatpush1.bf16.msra.mxu0 0
        %329 = vmatprep.subr.bf16.mxu0 0
        %330 = vmatpush1.bf16.msra.mxu0 0
        %331 = vmatprep.subr.bf16.mxu0 0
        %332 = vmatpush1.bf16.msra.mxu0 0
        %333 = vmatprep.subr.bf16.mxu0 0
        %334 = vmatpush1.bf16.msra.mxu0 0
        %335 = vmatprep.subr.bf16.mxu0 0
        %336 = vmatpush1.bf16.msra.mxu0 0
        %337 = vmatprep.subr.bf16.mxu0 0
        %338 = vmatpush1.bf16.msra.mxu0 0
        %339 = vmatprep.subr.bf16.mxu0 0
        %340 = vmatpush1.bf16.msra.mxu0 0
        %341 = vmatprep.subr.bf16.mxu0 0
        %342 = vmatpush1.bf16.msra.mxu0 0
        %343 = vmatprep.subr.bf16.mxu0 0
        %344 = vmatpush1.bf16.msra.mxu0 0
        %345 = vmatprep.subr.bf16.mxu0 0
        %346 = vmatpush1.bf16.msra.mxu0 0
        %347 = vmatprep.subr.bf16.mxu0 0
        %348 = vmatpush1.bf16.msra.mxu0 0
        %349 = vmatprep.subr.bf16.mxu0 0
        %350 = vmatpush1.bf16.msra.mxu0 0
        %351 = vmatprep.subr.bf16.mxu0 0
        %352 = vmatpush1.bf16.msra.mxu0 0
        %353 = vmatprep.subr.bf16.mxu0 0
        %354 = vmatpush1.bf16.msra.mxu0 0
        %355 = vmatprep.mubr.bf16.mxu0 0
        %356 = vmatmul.mubr.bf16.gmra.mrb[0].mxu0 %v317
        %v357 = vpop.f32.mrb[0].mxu0
        %v358 = vadd.f32 %v313, %v357
        %v359 = vpop.f32.mrb[0].mxu0
        %v360 = vpop.f32.mrb[0].mxu0
        %v361 = vpop.f32.mrb[0].mxu0
        %362 = vdwg.mxu0
        %v363 = vmax.f32 %v358, 0.0
        %v364 = vpack.c.bf16 %v363, %v363
        %v365 = vld [vmem:[#allocation2] sm:$0xf]
        %v366 = vld [vmem:[#allocation2 + $0x4] sm:$0xf]
        %v367 = vld [vmem:[#allocation2 + $0x8] sm:$0xf]
        %v368 = vld [vmem:[#allocation2 + $0xc] sm:$0xf]
        %v369 = vld [vmem:[#allocation2 + $0x10] sm:$0xf]
        %v370 = vld [vmem:[#allocation2 + $0x14] sm:$0xf]
        %v371 = vld [vmem:[#allocation2 + $0x18] sm:$0xf]
        %v372 = vld [vmem:[#allocation2 + $0x1c] sm:$0xf]
        %v373 = vld [vmem:[#allocation2 + $0x20] sm:$0xf]
        %v374 = vld [vmem:[#allocation2 + $0x24] sm:$0xf]
        %v375 = vld [vmem:[#allocation2 + $0x28] sm:$0xf]
        %v376 = vld [vmem:[#allocation2 + $0x2c] sm:$0xf]
        %v377 = vld [vmem:[#allocation2 + $0x30] sm:$0xf]
        %v378 = vld [vmem:[#allocation2 + $0x34] sm:$0xf]
        %v379 = vld [vmem:[#allocation2 + $0x38] sm:$0xf]
        %v380 = vld [vmem:[#allocation2 + $0x3c] sm:$0xf]
        %v381 = vld [vmem:[%s4] sm:$0x1]
        %v383 = vlaneseq
        %v384 = vshrl.u32 %v383, 7
        %v385 = vsub.s32 0, %v384
        %v386 = vrot.slane %v381, %v385
        %v404 = vunpack.c.l.b16 %v365
        %v405 = vunpack.c.l.b16 %v366
        %v406 = vunpack.c.l.b16 %v367
        %v407 = vunpack.c.l.b16 %v368
        %v408 = vunpack.c.l.b16 %v369
        %v409 = vunpack.c.l.b16 %v370
        %v410 = vunpack.c.l.b16 %v371
        %v411 = vunpack.c.l.b16 %v372
        %v412 = vunpack.c.l.b16 %v373
        %v413 = vunpack.c.l.b16 %v374
        %v414 = vunpack.c.l.b16 %v375
        %v415 = vunpack.c.l.b16 %v376
        %v416 = vunpack.c.l.b16 %v377
        %v417 = vunpack.c.l.b16 %v378
        %v418 = vunpack.c.l.b16 %v379
        %v419 = vunpack.c.l.b16 %v380
        %v420 = vpack.c.b16 %v405, %v404
        %v421 = vpack.c.b16 %v407, %v406
        %v422 = vpack.c.b16 %v409, %v408
        %v423 = vpack.c.b16 %v411, %v410
        %v424 = vpack.c.b16 %v413, %v412
        %v425 = vpack.c.b16 %v415, %v414
        %v426 = vpack.c.b16 %v417, %v416
        %v427 = vpack.c.b16 %v419, %v418
        %436 = vmatprep.subr.bf16.mxu0 0
        %437 = vmatpush1.bf16.msra.mxu0 %v420
        %438 = vmatprep.subr.bf16.mxu0 0
        %439 = vmatpush1.bf16.msra.mxu0 %v421
        %440 = vmatprep.subr.bf16.mxu0 0
        %441 = vmatpush1.bf16.msra.mxu0 %v422
        %442 = vmatprep.subr.bf16.mxu0 0
        %443 = vmatpush1.bf16.msra.mxu0 %v423
        %444 = vmatprep.subr.bf16.mxu0 0
        %445 = vmatpush1.bf16.msra.mxu0 %v424
        %446 = vmatprep.subr.bf16.mxu0 0
        %447 = vmatpush1.bf16.msra.mxu0 %v425
        %448 = vmatprep.subr.bf16.mxu0 0
        %449 = vmatpush1.bf16.msra.mxu0 %v426
        %450 = vmatprep.subr.bf16.mxu0 0
        %451 = vmatpush1.bf16.msra.mxu0 %v427
        %452 = vmatprep.subr.bf16.mxu0 0
        %453 = vmatpush1.bf16.msra.mxu0 0
        %454 = vmatprep.subr.bf16.mxu0 0
        %455 = vmatpush1.bf16.msra.mxu0 0
        %456 = vmatprep.subr.bf16.mxu0 0
        %457 = vmatpush1.bf16.msra.mxu0 0
        %458 = vmatprep.subr.bf16.mxu0 0
        %459 = vmatpush1.bf16.msra.mxu0 0
        %460 = vmatprep.subr.bf16.mxu0 0
        %461 = vmatpush1.bf16.msra.mxu0 0
        %462 = vmatprep.subr.bf16.mxu0 0
        %463 = vmatpush1.bf16.msra.mxu0 0
        %464 = vmatprep.subr.bf16.mxu0 0
        %465 = vmatpush1.bf16.msra.mxu0 0
        %466 = vmatprep.subr.bf16.mxu0 0
        %467 = vmatpush1.bf16.msra.mxu0 0
        %468 = vmatprep.mubr.bf16.mxu0 0
        %469 = vmatmul.mubr.bf16.gmra.mrb[0].mxu0 %v364
        %v470 = vpop.f32.mrb[0].mxu0
        %v471 = vadd.f32 %v386, %v470
        %v472 = vpop.f32.mrb[0].mxu0
        %v473 = vpop.f32.mrb[0].mxu0
        %v474 = vpop.f32.mrb[0].mxu0
        %475 = vdwg.mxu0
        %v476 = vmax.f32 %v471, 0.0
        %v477 = vpack.c.bf16 %v476, %v476
        %v478 = vld [vmem:[#allocation5] sm:$0xf]
        %v479 = vld [vmem:[#allocation5 + $0x4] sm:$0xf]
        %v480 = vld [vmem:[#allocation5 + $0x8] sm:$0xf]
        %v481 = vld [vmem:[#allocation5 + $0xc] sm:$0xf]
        %v482 = vld [vmem:[#allocation5 + $0x10] sm:$0xf]
        %v483 = vld [vmem:[#allocation5 + $0x14] sm:$0xf]
        %v484 = vld [vmem:[#allocation5 + $0x18] sm:$0xf]
        %v485 = vld [vmem:[#allocation5 + $0x1c] sm:$0xf]
        %v486 = vld [vmem:[#allocation5 + $0x20] sm:$0xf]
        %v487 = vld [vmem:[#allocation5 + $0x24] sm:$0xf]
        %v488 = vld [vmem:[#allocation5 + $0x28] sm:$0xf]
        %v489 = vld [vmem:[#allocation5 + $0x2c] sm:$0xf]
        %v490 = vld [vmem:[#allocation5 + $0x30] sm:$0xf]
        %v491 = vld [vmem:[#allocation5 + $0x34] sm:$0xf]
        %v492 = vld [vmem:[#allocation5 + $0x38] sm:$0xf]
        %v493 = vld [vmem:[#allocation5 + $0x3c] sm:$0xf]
        %v494 = vld [vmem:[%s6] sm:$0x1]
        %v496 = vlaneseq
        %v497 = vshrl.u32 %v496, 7
        %v498 = vsub.s32 0, %v497
        %v499 = vrot.slane %v494, %v498
        %v517 = vunpack.c.l.b16 %v478
        %v518 = vunpack.c.l.b16 %v479
        %v519 = vunpack.c.l.b16 %v480
        %v520 = vunpack.c.l.b16 %v481
        %v521 = vunpack.c.l.b16 %v482
        %v522 = vunpack.c.l.b16 %v483
        %v523 = vunpack.c.l.b16 %v484
        %v524 = vunpack.c.l.b16 %v485
        %v525 = vunpack.c.l.b16 %v486
        %v526 = vunpack.c.l.b16 %v487
        %v527 = vunpack.c.l.b16 %v488
        %v528 = vunpack.c.l.b16 %v489
        %v529 = vunpack.c.l.b16 %v490
        %v530 = vunpack.c.l.b16 %v491
        %v531 = vunpack.c.l.b16 %v492
        %v532 = vunpack.c.l.b16 %v493
        %v533 = vpack.c.b16 %v518, %v517
        %v534 = vpack.c.b16 %v520, %v519
        %v535 = vpack.c.b16 %v522, %v521
        %v536 = vpack.c.b16 %v524, %v523
        %v537 = vpack.c.b16 %v526, %v525
        %v538 = vpack.c.b16 %v528, %v527
        %v539 = vpack.c.b16 %v530, %v529
        %v540 = vpack.c.b16 %v532, %v531
        %549 = vmatprep.subr.bf16.mxu0 0
        %550 = vmatpush1.bf16.msra.mxu0 %v533
        %551 = vmatprep.subr.bf16.mxu0 0
        %552 = vmatpush1.bf16.msra.mxu0 %v534
        %553 = vmatprep.subr.bf16.mxu0 0
        %554 = vmatpush1.bf16.msra.mxu0 %v535
        %555 = vmatprep.subr.bf16.mxu0 0
        %556 = vmatpush1.bf16.msra.mxu0 %v536
        %557 = vmatprep.subr.bf16.mxu0 0
        %558 = vmatpush1.bf16.msra.mxu0 %v537
        %559 = vmatprep.subr.bf16.mxu0 0
        %560 = vmatpush1.bf16.msra.mxu0 %v538
        %561 = vmatprep.subr.bf16.mxu0 0
        %562 = vmatpush1.bf16.msra.mxu0 %v539
        %563 = vmatprep.subr.bf16.mxu0 0
        %564 = vmatpush1.bf16.msra.mxu0 %v540
        %565 = vmatprep.subr.bf16.mxu0 0
        %566 = vmatpush1.bf16.msra.mxu0 0
        %567 = vmatprep.subr.bf16.mxu0 0
        %568 = vmatpush1.bf16.msra.mxu0 0
        %569 = vmatprep.subr.bf16.mxu0 0
        %570 = vmatpush1.bf16.msra.mxu0 0
        %571 = vmatprep.subr.bf16.mxu0 0
        %572 = vmatpush1.bf16.msra.mxu0 0
        %573 = vmatprep.subr.bf16.mxu0 0
        %574 = vmatpush1.bf16.msra.mxu0 0
        %575 = vmatprep.subr.bf16.mxu0 0
        %576 = vmatpush1.bf16.msra.mxu0 0
        %577 = vmatprep.subr.bf16.mxu0 0
        %578 = vmatpush1.bf16.msra.mxu0 0
        %579 = vmatprep.subr.bf16.mxu0 0
        %580 = vmatpush1.bf16.msra.mxu0 0
        %581 = vmatprep.mubr.bf16.mxu0 0
        %582 = vmatmul.mubr.bf16.gmra.mrb[0].mxu0 %v477
        %v583 = vpop.f32.mrb[0].mxu0
        %v584 = vadd.f32 %v499, %v583
        %v585 = vpop.f32.mrb[0].mxu0
        %v586 = vpop.f32.mrb[0].mxu0
        %v587 = vpop.f32.mrb[0].mxu0
        %588 = vdwg.mxu0
        %v589 = vmul.f32 %v584, 0.5
        %v590 = vtanh.pop %v589
        %v591 = vadd.f32 %v590, 1.0
        %v592 = vmul.f32 %v591, 0.5
        %593 = vst [vmem:[%s299] sm:$0xff] %v592
        %s594 = sand.u32 %s183, 1
        %s595 = scalar_lea.sflag [#allocation4], %s594
        %s596 = sand.u32 %s183, 1
        %s597 = smul.addr %s596, 8
        %s598 = scalar_lea.vmem [#allocation7], %s597
        // Predicated region
        $region57: #{decoder_forward.1} parent=47 // pred_check
          %p599 = pneg %p193
        $region58: #{decoder_forward.1} parent=47 // pred_check_branch
          %601 = sbr.rel (%p599) target = $region60
        $region59: #{decoder_forward.1} parent=47 // pred_region
          %s603 = ssub.s32 128, 128
          %604 = vsyncadd %s595, %s603
          %s605 = smul.addr %s23, 128
          %s606 = scalar_lea.hbm %s7, %s605
          %s608 = sshll.u32 %s598, 4
          %s609 = int_to_ptr.vmem [resolvable:$true] %s608
          %611 = dma.vmem_to_hbm [thread:$0]  %s609, 128, %s606, %s595
        $region60: #{decoder_forward.1} parent=47 // pred_fallthru
          _
      $region48: #{decoder_forward.1} parent=5 // pred_fallthru
        _
      %p612 = scmp.le.s32.totalorder 2, %s18
      // Predicated region
      $region61: #{decoder_forward.1} parent=5 // pred_check
        %p613 = pneg %p612
      $region62: #{decoder_forward.1} parent=5 // pred_check_branch
        %615 = sbr.rel (%p613) target = $region64
      $region63: #{decoder_forward.1} parent=5 // pred_region
        %s616 = ssub.s32 %s18, 2
        // Predicated region
        $region65: #{decoder_forward.1} parent=63 // pred_check
          %p617 = pneg %p199
        $region66: #{decoder_forward.1} parent=63 // pred_check_branch
          %619 = sbr.rel (%p617) target = $region68
        $region67: #{decoder_forward.1} parent=63 // pred_region
          %s620 = sand.u32 %s184, 1
          %s621 = scalar_lea.sflag [#allocation4], %s620
          %s622 = sand.u32 %s184, 1
          %s623 = smul.addr %s622, 8
          %s624 = scalar_lea.vmem [#allocation7], %s623
          %625 = dma.done %s621, 128
        $region68: #{decoder_forward.1} parent=63 // pred_fallthru
          _
      $region64: #{decoder_forward.1} parent=5 // pred_fallthru
        _
    $region6: #{decoder_forward.1} parent=1 // loop_footer
      %s22 = sadd.s32 1, %s18
    $region7: #{decoder_forward.1} parent=1 // loop_footer_branch
      %17 = sbr.rel target = $region3
    $region8: #{decoder_forward.1} parent=1 // loop_exit
      _
    %626 = vsyncpa [#allocation3], 1
    %s627 = scalar_lea.sflag [#allocation3], 1
    %628 = vsyncpa %s627, 1
    %629 = vsyncpa [#allocation6], 1
    %630 = vsyncpa [#allocation4], 1
    %s631 = scalar_lea.sflag [#allocation4], 1
    %632 = vsyncpa %s631, 1

</llo_original>
